<compile_context>
chip_gen: v5e
topology: v5e:2x2
jax: 0.10.0
libtpu: 0.0.40
codegen_flags: <defaults>
</compile_context>

<pallas_src>
import functools
import math

import jax
import jax.numpy as jnp
from jax.experimental import pallas as pl
from jax.experimental.pallas import tpu as pltpu

LANE = 128
SUBLANE = 8


def _round_up(n, m):
    return (n + m - 1) // m * m


# ------------------------------ fused kernel ------------------------------- #

def _fused_mlp_kernel(*refs, n_trunk_layers, n_task_layers, skip_connections):
    """Entire MultiTaskMLP forward for one batch tile.

    Ref order (all whole-array VMEM blocks; weights pre-transposed / packed):
      x (TB, In),
      [trunk layer l : W (In, H),  b (1, H) ] * n_trunk_layers,
      trunk output   : W (H, H),   b (1, H),
      head layer 0   : W (H, 128), b (1, 128)     (task-concatenated, lane-padded),
      [head layer l>=1: W (128,128), b (1,128)] * (n_task_layers-1)  (block-diag),
      head output    : W (128,128), b (1, 128)    (block-diag, lane-padded),
      out (TB, 128).
    """
    o_ref = refs[-1]
    refs = refs[:-1]
    f32 = jnp.float32

    idx = 0
    h = refs[idx][...].astype(f32); idx += 1                  # (TB, In)

    def dense(h, w_ref, b_ref):
        # MXU operands in the packed weight dtype (bf16 on v6e/v7x), f32 accumulate.
        # Bias add / residual / ReLU stay in f32 (v5e VPU has no bf16).
        w = w_ref[...]
        return jnp.dot(h.astype(w.dtype), w, preferred_element_type=f32) + b_ref[...]

    # ---------------- trunk hidden layers (statically unrolled) -------------
    for li in range(n_trunk_layers):
        y = dense(h, refs[idx], refs[idx + 1]); idx += 2
        if skip_connections and (li % 2 == 1):
            y = h + y                                         # pre-ReLU residual
        h = jnp.maximum(y, 0.0)

    # ---------------- trunk output layer (no ReLU) --------------------------
    h = dense(h, refs[idx], refs[idx + 1]); idx += 2          # (TB, H)

    # ---------------- head layer 0: task-concatenated lanes -----------------
    # The trunk->head broadcast is free: one (TB,H)@(H,128) matmul feeds all tasks.
    # Padded lanes stay exactly 0 (zero weight cols + zero bias + ReLU).
    h = jnp.maximum(dense(h, refs[idx], refs[idx + 1]), 0.0); idx += 2   # (TB, 128)

    # ---------------- head layers >= 1: block-diagonal, ONE matmul each -----
    for li in range(1, n_task_layers):
        y = dense(h, refs[idx], refs[idx + 1]); idx += 2
        if skip_connections and (li % 2 == 1):
            y = h + y
        h = jnp.maximum(y, 0.0)

    # ---------------- head output layer: block-diag, lane-dense store -------
    o_ref[...] = dense(h, refs[idx], refs[idx + 1]).astype(o_ref.dtype)


# --------------------------------- wrapper ---------------------------------- #

def multitask_mlp_forward(x, flat_params, *, n_trunk_res_block, n_task_layers,
                          n_tasks, output_size, skip_connections):
    B, in_size = x.shape
    TO = n_tasks * output_size
    TO_pad = flat_params[-2].shape[-1]            # lane-padded head-output width

    # Pad batch to an 8-sublane multiple and tile it along a "parallel" grid axis
    # (independent rows -> megacore/2-TC sharding on v7x for large batches).
    B_pad = _round_up(B, SUBLANE)
    tb = B_pad if B_pad <= 256 else 256
    B_pad = _round_up(B_pad, tb)
    grid = (B_pad // tb,)
    x_p = jnp.pad(x, ((0, B_pad - B), (0, 0))) if B_pad != B else x

    inputs = [x_p] + list(flat_params)
    in_specs = [pl.BlockSpec((tb, in_size), lambda i: (i, 0))]
    # All packed params are 2D whole-array blocks, resident for every grid step.
    in_specs += [pl.BlockSpec(a.shape, lambda i: (0, 0)) for a in flat_params]

    kern = functools.partial(
        _fused_mlp_kernel,
        n_trunk_layers=n_trunk_res_block,
        n_task_layers=n_task_layers,
        skip_connections=skip_connections,
    )

    # Advisory cost hint: this kernel is latency/overhead bound, not FLOP bound.
    flops = sum(2 * B_pad * w.shape[0] * w.shape[1] for w in flat_params[0::2])
    bytes_accessed = (x_p.size * x_p.dtype.itemsize
                      + sum(a.size * a.dtype.itemsize for a in flat_params)
                      + B_pad * TO_pad * x.dtype.itemsize)

    out = pl.pallas_call(
        kern,
        out_shape=jax.ShapeDtypeStruct((B_pad, TO_pad), x.dtype),
        grid=grid,
        in_specs=in_specs,
        out_specs=pl.BlockSpec((tb, TO_pad), lambda i: (i, 0)),
        compiler_params=pltpu.CompilerParams(
            dimension_semantics=("parallel",)),
        cost_estimate=pl.CostEstimate(flops=flops, transcendentals=0,
                                      bytes_accessed=bytes_accessed),
    )(*inputs)
    # Slice off lane/batch padding (cheap), then a free row-major reshape:
    # lanes are task-major [t0 o0..o7 | t1 ... | t2 ...] == movedim(0,1) of (T,B,O).
    return out[:B, :TO].reshape(B, n_tasks, output_size)


# ----------------------- parameter init (deterministic) -------------------- #

def init_params(key, *, input_size, trunk_hidden_size, n_trunk_res_block,
                n_tasks, task_hidden_size, n_task_layers, output_size):
    """PyTorch-convention parameter shapes (Linear: W (out,in); ParallelLinear: (T,in,out))."""
    def linear_init(k, fan_in, fan_out):
        bound = 1.0 / math.sqrt(fan_in)
        kw, kb = jax.random.split(k)
        w = jax.random.uniform(kw, (fan_out, fan_in), jnp.float32, -bound, bound)
        b = jax.random.uniform(kb, (fan_out,), jnp.float32, -bound, bound)
        return w, b

    def parallel_init(k, n_models, fan_in, fan_out):
        stdv = 1.0 / math.sqrt(fan_in)
        kw, kb = jax.random.split(k)
        w = jax.random.uniform(kw, (n_models, fan_in, fan_out), jnp.float32, -stdv, stdv)
        b = jax.random.uniform(kb, (n_models, 1, fan_out), jnp.float32, -stdv, stdv)
        return w, b

    keys = jax.random.split(key, 2 + n_trunk_res_block + n_task_layers)
    ki = iter(keys)

    trunk_layers = [linear_init(next(ki), input_size, trunk_hidden_size)]
    for _ in range(n_trunk_res_block - 1):
        trunk_layers.append(linear_init(next(ki), trunk_hidden_size, trunk_hidden_size))
    trunk_out = linear_init(next(ki), trunk_hidden_size, trunk_hidden_size)

    head_layers = [parallel_init(next(ki), n_tasks, trunk_hidden_size, task_hidden_size)]
    for _ in range(n_task_layers - 1):
        head_layers.append(parallel_init(next(ki), n_tasks, task_hidden_size, task_hidden_size))
    head_out = parallel_init(next(ki), n_tasks, task_hidden_size, output_size)

    return dict(trunk_layers=trunk_layers, trunk_out=trunk_out,
                head_layers=head_layers, head_out=head_out)


def pack_params(params, *, weight_dtype=jnp.float32):
    """One-time layout transform (NOT per forward):
      * trunk Linear weights transposed to (In, Out); biases as (1, Out) f32 rows;
      * head layer 0 concatenated across tasks along output lanes, padded to 128;
      * head layers >= 1 and head output packed as zero-padded block-diagonal
        (128, 128) weights -> each head layer is ONE lane-dense MXU matmul;
      * weights optionally cast to bf16 (MXU operands); biases stay f32."""
    f32 = jnp.float32

    def block_diag(w):                           # (T, In, Out) -> (T*In, T*Out)
        T, In, Out = w.shape
        bd = jnp.zeros((T * In, T * Out), f32)
        for t in range(T):
            bd = bd.at[t * In:(t + 1) * In, t * Out:(t + 1) * Out].set(w[t])
        return bd

    def pad_to(a, rows, cols):
        return jnp.pad(a, ((0, rows - a.shape[0]), (0, cols - a.shape[1])))

    # Residual path requires square hidden layers at odd indices (guaranteed by
    # the module constructor; asserted here per review feedback).
    for li, (w, _) in enumerate(params["trunk_layers"]):
        if li % 2 == 1:
            assert w.shape[0] == w.shape[1], "residual needs matching in/out width"
    for li, (w, _) in enumerate(params["head_layers"]):
        if li % 2 == 1:
            assert w.shape[1] == w.shape[2], "residual needs matching in/out width"

    flat = []
    for w, b in params["trunk_layers"]:
        flat += [jnp.asarray(w.T, weight_dtype), b.reshape(1, -1).astype(f32)]
    w, b = params["trunk_out"]
    flat += [jnp.asarray(w.T, weight_dtype), b.reshape(1, -1).astype(f32)]

    w0, b0 = params["head_layers"][0]            # (T, H, Ht), (T, 1, Ht)
    T, H, Ht = w0.shape
    TH, TH_pad = T * Ht, _round_up(T * Ht, LANE)
    w0_cat = jnp.transpose(w0, (1, 0, 2)).reshape(H, TH)
    flat += [pad_to(w0_cat, H, TH_pad).astype(weight_dtype),
             pad_to(b0.reshape(1, TH), 1, TH_pad).astype(f32)]

    for w, b in params["head_layers"][1:]:       # (T, Ht, Ht), (T, 1, Ht)
        flat += [pad_to(block_diag(w), TH_pad, TH_pad).astype(weight_dtype),
                 pad_to(b.reshape(1, TH), 1, TH_pad).astype(f32)]

    w, b = params["head_out"]                    # (T, Ht, O), (T, 1, O)
    O = w.shape[-1]
    TO, TO_pad = T * O, _round_up(T * O, LANE)
    flat += [pad_to(block_diag(w), TH_pad, TO_pad).astype(weight_dtype),
             pad_to(b.reshape(1, TO), 1, TO_pad).astype(f32)]
    return flat


# ------------------------------- reference --------------------------------- #

def ref_forward(x, params, *, skip_connections):
    """Pure-JAX reference matching the PyTorch module semantics (f32)."""
    h = x
    for idx, (w, b) in enumerate(params["trunk_layers"]):
        y = h @ w.T + b
        if skip_connections and idx % 2 == 1:
            y = h + y
        h = jax.nn.relu(y)
    w, b = params["trunk_out"]
    h = h @ w.T + b
    n_tasks = params["head_out"][0].shape[0]
    h = jnp.broadcast_to(h[None], (n_tasks,) + h.shape)
    for idx, (w, b) in enumerate(params["head_layers"]):
        y = jnp.einsum("tbi,tio->tbo", h, w) + b
        if skip_connections and idx % 2 == 1:
            y = h + y
        h = jax.nn.relu(y)
    w, b = params["head_out"]
    h = jnp.einsum("tbi,tio->tbo", h, w) + b
    return jnp.moveaxis(h, 0, 1)


# ----------------------------------- main ----------------------------------- #

if __name__ == "__main__":
    # Small config consistent with MultiTaskMLP.__init__
    input_size = 16
    trunk_hidden_size = 32
    n_trunk_res_block = 3
    n_tasks = 3
    task_hidden_size = 32
    n_task_layers = 2
    output_size = 8
    skip_connections = True
    # dropout = 0.0 -> identity (use_dropout=False); no dropout op needed.
    batch = 4          # wrapper pads to 8 sublanes internally

    key = jax.random.PRNGKey(0)
    kx, kp = jax.random.split(key)
    x = jax.random.normal(kx, (batch, input_size), jnp.float32)
    params = init_params(
        kp,
        input_size=input_size,
        trunk_hidden_size=trunk_hidden_size,
        n_trunk_res_block=n_trunk_res_block,
        n_tasks=n_tasks,
        task_hidden_size=task_hidden_size,
        n_task_layers=n_task_layers,
        output_size=output_size,
    )

    fwd = jax.jit(functools.partial(
        multitask_mlp_forward,
        n_trunk_res_block=n_trunk_res_block,
        n_task_layers=n_task_layers,
        n_tasks=n_tasks,
        output_size=output_size,
        skip_connections=skip_connections,
    ))

    ref = jax.block_until_ready(ref_forward(x, params, skip_connections=skip_connections))

    # f32 weight path: strict correctness check vs the pure-JAX reference.
    flat_f32 = pack_params(params, weight_dtype=jnp.float32)
    out_f32 = jax.block_until_ready(fwd(x, flat_f32))
    assert out_f32.shape == (batch, n_tasks, output_size), out_f32.shape
    assert jnp.allclose(out_f32, ref, atol=1e-5, rtol=1e-5), "f32 mismatch vs reference"

    # bf16 MXU-operand path (v6e/v7x fast path; f32 accumulate): loose check.
    flat_bf16 = pack_params(params, weight_dtype=jnp.bfloat16)
    out_bf16 = jax.block_until_ready(fwd(x, flat_bf16))
    assert out_bf16.shape == (batch, n_tasks, output_size), out_bf16.shape
    assert jnp.allclose(out_bf16, ref, atol=5e-2, rtol=5e-2), "bf16 mismatch vs reference"

    print("KERNEL_OK")
</pallas_src>

<mosaic_0001>
module attributes {stable_mosaic.version = 11 : i64} {
  func.func @_fused_mlp_kernel(%arg0: i32, %arg1: memref<8x16xf32, #tpu.memory_space<vmem>>, %arg2: memref<16x32xf32, #tpu.memory_space<vmem>>, %arg3: memref<1x32xf32, #tpu.memory_space<vmem>>, %arg4: memref<32x32xf32, #tpu.memory_space<vmem>>, %arg5: memref<1x32xf32, #tpu.memory_space<vmem>>, %arg6: memref<32x32xf32, #tpu.memory_space<vmem>>, %arg7: memref<1x32xf32, #tpu.memory_space<vmem>>, %arg8: memref<32x32xf32, #tpu.memory_space<vmem>>, %arg9: memref<1x32xf32, #tpu.memory_space<vmem>>, %arg10: memref<32x128xf32, #tpu.memory_space<vmem>>, %arg11: memref<1x128xf32, #tpu.memory_space<vmem>>, %arg12: memref<128x128xf32, #tpu.memory_space<vmem>>, %arg13: memref<1x128xf32, #tpu.memory_space<vmem>>, %arg14: memref<128x128xf32, #tpu.memory_space<vmem>>, %arg15: memref<1x128xf32, #tpu.memory_space<vmem>>, %arg16: memref<8x128xf32, #tpu.memory_space<vmem>>) attributes {dimension_semantics = [#tpu.dimension_semantics<parallel>], iteration_bounds = array<i64: 1>, scalar_prefetch = 0 : i64, scratch_operands = 0 : i64, tpu.core_type = #tpu.core_type<tc>, window_params = [{transform_indices = @transform_0, window_bounds = array<i64: 8, 16>}, {pipeline_mode = #tpu.pipeline_mode<synchronous>, transform_indices = @transform_1, window_bounds = array<i64: 16, 32>}, {pipeline_mode = #tpu.pipeline_mode<synchronous>, transform_indices = @transform_2, window_bounds = array<i64: 1, 32>}, {pipeline_mode = #tpu.pipeline_mode<synchronous>, transform_indices = @transform_3, window_bounds = array<i64: 32, 32>}, {pipeline_mode = #tpu.pipeline_mode<synchronous>, transform_indices = @transform_4, window_bounds = array<i64: 1, 32>}, {pipeline_mode = #tpu.pipeline_mode<synchronous>, transform_indices = @transform_5, window_bounds = array<i64: 32, 32>}, {pipeline_mode = #tpu.pipeline_mode<synchronous>, transform_indices = @transform_6, window_bounds = array<i64: 1, 32>}, {pipeline_mode = #tpu.pipeline_mode<synchronous>, transform_indices = @transform_7, window_bounds = array<i64: 32, 32>}, {pipeline_mode = #tpu.pipeline_mode<synchronous>, transform_indices = @transform_8, window_bounds = array<i64: 1, 32>}, {pipeline_mode = #tpu.pipeline_mode<synchronous>, transform_indices = @transform_9, window_bounds = array<i64: 32, 128>}, {pipeline_mode = #tpu.pipeline_mode<synchronous>, transform_indices = @transform_10, window_bounds = array<i64: 1, 128>}, {pipeline_mode = #tpu.pipeline_mode<synchronous>, transform_indices = @transform_11, window_bounds = array<i64: 128, 128>}, {pipeline_mode = #tpu.pipeline_mode<synchronous>, transform_indices = @transform_12, window_bounds = array<i64: 1, 128>}, {pipeline_mode = #tpu.pipeline_mode<synchronous>, transform_indices = @transform_13, window_bounds = array<i64: 128, 128>}, {pipeline_mode = #tpu.pipeline_mode<synchronous>, transform_indices = @transform_14, window_bounds = array<i64: 1, 128>}, {transform_indices = @transform_15, window_bounds = array<i64: 8, 128>}]} {
    %c0 = arith.constant 0 : index
    %c0_0 = arith.constant 0 : index
    %0 = vector.load %arg1[%c0, %c0_0] : memref<8x16xf32, #tpu.memory_space<vmem>>, vector<8x16xf32>
    %c0_1 = arith.constant 0 : index
    %c0_2 = arith.constant 0 : index
    %1 = vector.load %arg2[%c0_1, %c0_2] : memref<16x32xf32, #tpu.memory_space<vmem>>, vector<16x32xf32>
    %cst = arith.constant dense<0.000000e+00> : vector<8x32xf32>
    %2 = tpu.matmul %0, %1, %cst {dimension_numbers = #tpu.dot_dimension_numbers<[1], [0], [0], [1], [0, 0, 1, 1], [], []>} : vector<8x16xf32>, vector<16x32xf32>, vector<8x32xf32> -> vector<8x32xf32>
    %c0_3 = arith.constant 0 : index
    %c0_4 = arith.constant 0 : index
    %3 = vector.load %arg3[%c0_3, %c0_4] : memref<1x32xf32, #tpu.memory_space<vmem>>, vector<1x32xf32>
    %4 = vector.broadcast %3 : vector<1x32xf32> to vector<8x32xf32>
    %5 = arith.addf %2, %4 : vector<8x32xf32>
    %cst_5 = arith.constant 0.000000e+00 : f32
    %6 = vector.broadcast %cst_5 : f32 to vector<8x32xf32>
    %7 = arith.maximumf %5, %6 : vector<8x32xf32>
    %c0_6 = arith.constant 0 : index
    %c0_7 = arith.constant 0 : index
    %8 = vector.load %arg4[%c0_6, %c0_7] : memref<32x32xf32, #tpu.memory_space<vmem>>, vector<32x32xf32>
    %cst_8 = arith.constant dense<0.000000e+00> : vector<8x32xf32>
    %9 = tpu.matmul %7, %8, %cst_8 {dimension_numbers = #tpu.dot_dimension_numbers<[1], [0], [0], [1], [0, 0, 1, 1], [], []>} : vector<8x32xf32>, vector<32x32xf32>, vector<8x32xf32> -> vector<8x32xf32>
    %c0_9 = arith.constant 0 : index
    %c0_10 = arith.constant 0 : index
    %10 = vector.load %arg5[%c0_9, %c0_10] : memref<1x32xf32, #tpu.memory_space<vmem>>, vector<1x32xf32>
    %11 = vector.broadcast %10 : vector<1x32xf32> to vector<8x32xf32>
    %12 = arith.addf %9, %11 : vector<8x32xf32>
    %13 = arith.addf %7, %12 : vector<8x32xf32>
    %cst_11 = arith.constant 0.000000e+00 : f32
    %14 = vector.broadcast %cst_11 : f32 to vector<8x32xf32>
    %15 = arith.maximumf %13, %14 : vector<8x32xf32>
    %c0_12 = arith.constant 0 : index
    %c0_13 = arith.constant 0 : index
    %16 = vector.load %arg6[%c0_12, %c0_13] : memref<32x32xf32, #tpu.memory_space<vmem>>, vector<32x32xf32>
    %cst_14 = arith.constant dense<0.000000e+00> : vector<8x32xf32>
    %17 = tpu.matmul %15, %16, %cst_14 {dimension_numbers = #tpu.dot_dimension_numbers<[1], [0], [0], [1], [0, 0, 1, 1], [], []>} : vector<8x32xf32>, vector<32x32xf32>, vector<8x32xf32> -> vector<8x32xf32>
    %c0_15 = arith.constant 0 : index
    %c0_16 = arith.constant 0 : index
    %18 = vector.load %arg7[%c0_15, %c0_16] : memref<1x32xf32, #tpu.memory_space<vmem>>, vector<1x32xf32>
    %19 = vector.broadcast %18 : vector<1x32xf32> to vector<8x32xf32>
    %20 = arith.addf %17, %19 : vector<8x32xf32>
    %cst_17 = arith.constant 0.000000e+00 : f32
    %21 = vector.broadcast %cst_17 : f32 to vector<8x32xf32>
    %22 = arith.maximumf %20, %21 : vector<8x32xf32>
    %c0_18 = arith.constant 0 : index
    %c0_19 = arith.constant 0 : index
    %23 = vector.load %arg8[%c0_18, %c0_19] : memref<32x32xf32, #tpu.memory_space<vmem>>, vector<32x32xf32>
    %cst_20 = arith.constant dense<0.000000e+00> : vector<8x32xf32>
    %24 = tpu.matmul %22, %23, %cst_20 {dimension_numbers = #tpu.dot_dimension_numbers<[1], [0], [0], [1], [0, 0, 1, 1], [], []>} : vector<8x32xf32>, vector<32x32xf32>, vector<8x32xf32> -> vector<8x32xf32>
    %c0_21 = arith.constant 0 : index
    %c0_22 = arith.constant 0 : index
    %25 = vector.load %arg9[%c0_21, %c0_22] : memref<1x32xf32, #tpu.memory_space<vmem>>, vector<1x32xf32>
    %26 = vector.broadcast %25 : vector<1x32xf32> to vector<8x32xf32>
    %27 = arith.addf %24, %26 : vector<8x32xf32>
    %c0_23 = arith.constant 0 : index
    %c0_24 = arith.constant 0 : index
    %28 = vector.load %arg10[%c0_23, %c0_24] : memref<32x128xf32, #tpu.memory_space<vmem>>, vector<32x128xf32>
    %cst_25 = arith.constant dense<0.000000e+00> : vector<8x128xf32>
    %29 = tpu.matmul %27, %28, %cst_25 {dimension_numbers = #tpu.dot_dimension_numbers<[1], [0], [0], [1], [0, 0, 1, 1], [], []>} : vector<8x32xf32>, vector<32x128xf32>, vector<8x128xf32> -> vector<8x128xf32>
    %c0_26 = arith.constant 0 : index
    %c0_27 = arith.constant 0 : index
    %30 = vector.load %arg11[%c0_26, %c0_27] : memref<1x128xf32, #tpu.memory_space<vmem>>, vector<1x128xf32>
    %31 = vector.broadcast %30 : vector<1x128xf32> to vector<8x128xf32>
    %32 = arith.addf %29, %31 : vector<8x128xf32>
    %cst_28 = arith.constant 0.000000e+00 : f32
    %33 = vector.broadcast %cst_28 : f32 to vector<8x128xf32>
    %34 = arith.maximumf %32, %33 : vector<8x128xf32>
    %c0_29 = arith.constant 0 : index
    %c0_30 = arith.constant 0 : index
    %35 = vector.load %arg12[%c0_29, %c0_30] : memref<128x128xf32, #tpu.memory_space<vmem>>, vector<128x128xf32>
    %cst_31 = arith.constant dense<0.000000e+00> : vector<8x128xf32>
    %36 = tpu.matmul %34, %35, %cst_31 {dimension_numbers = #tpu.dot_dimension_numbers<[1], [0], [0], [1], [0, 0, 1, 1], [], []>} : vector<8x128xf32>, vector<128x128xf32>, vector<8x128xf32> -> vector<8x128xf32>
    %c0_32 = arith.constant 0 : index
    %c0_33 = arith.constant 0 : index
    %37 = vector.load %arg13[%c0_32, %c0_33] : memref<1x128xf32, #tpu.memory_space<vmem>>, vector<1x128xf32>
    %38 = vector.broadcast %37 : vector<1x128xf32> to vector<8x128xf32>
    %39 = arith.addf %36, %38 : vector<8x128xf32>
    %40 = arith.addf %34, %39 : vector<8x128xf32>
    %cst_34 = arith.constant 0.000000e+00 : f32
    %41 = vector.broadcast %cst_34 : f32 to vector<8x128xf32>
    %42 = arith.maximumf %40, %41 : vector<8x128xf32>
    %c0_35 = arith.constant 0 : index
    %c0_36 = arith.constant 0 : index
    %43 = vector.load %arg14[%c0_35, %c0_36] : memref<128x128xf32, #tpu.memory_space<vmem>>, vector<128x128xf32>
    %cst_37 = arith.constant dense<0.000000e+00> : vector<8x128xf32>
    %44 = tpu.matmul %42, %43, %cst_37 {dimension_numbers = #tpu.dot_dimension_numbers<[1], [0], [0], [1], [0, 0, 1, 1], [], []>} : vector<8x128xf32>, vector<128x128xf32>, vector<8x128xf32> -> vector<8x128xf32>
    %c0_38 = arith.constant 0 : index
    %c0_39 = arith.constant 0 : index
    %45 = vector.load %arg15[%c0_38, %c0_39] : memref<1x128xf32, #tpu.memory_space<vmem>>, vector<1x128xf32>
    %46 = vector.broadcast %45 : vector<1x128xf32> to vector<8x128xf32>
    %47 = arith.addf %44, %46 : vector<8x128xf32>
    %c0_40 = arith.constant 0 : index
    %c0_41 = arith.constant 0 : index
    %48 = vector.load %arg16[%c0_40, %c0_41] : memref<8x128xf32, #tpu.memory_space<vmem>>, vector<8x128xf32>
    tpu.vector_store %arg16[%c0_40, %c0_41], %47 {strides = array<i32>} : memref<8x128xf32, #tpu.memory_space<vmem>>, vector<8x128xf32>,
    return
  }
  func.func @transform_0(%arg0: i32) -> (i32, i32) {
    %c0_i32 = arith.constant 0 : i32
    %c0_i32_0 = arith.constant 0 : i32
    return %arg0, %c0_i32 : i32, i32
  }
  func.func @transform_1(%arg0: i32) -> (i32, i32) {
    %c0_i32 = arith.constant 0 : i32
    %c0_i32_0 = arith.constant 0 : i32
    %c0_i32_1 = arith.constant 0 : i32
    return %c0_i32, %c0_i32_0 : i32, i32
  }
  func.func @transform_2(%arg0: i32) -> (i32, i32) {
    %c0_i32 = arith.constant 0 : i32
    %c0_i32_0 = arith.constant 0 : i32
    %c0_i32_1 = arith.constant 0 : i32
    return %c0_i32, %c0_i32_0 : i32, i32
  }
  func.func @transform_3(%arg0: i32) -> (i32, i32) {
    %c0_i32 = arith.constant 0 : i32
    %c0_i32_0 = arith.constant 0 : i32
    %c0_i32_1 = arith.constant 0 : i32
    return %c0_i32, %c0_i32_0 : i32, i32
  }
  func.func @transform_4(%arg0: i32) -> (i32, i32) {
    %c0_i32 = arith.constant 0 : i32
    %c0_i32_0 = arith.constant 0 : i32
    %c0_i32_1 = arith.constant 0 : i32
    return %c0_i32, %c0_i32_0 : i32, i32
  }
  func.func @transform_5(%arg0: i32) -> (i32, i32) {
    %c0_i32 = arith.constant 0 : i32
    %c0_i32_0 = arith.constant 0 : i32
    %c0_i32_1 = arith.constant 0 : i32
    return %c0_i32, %c0_i32_0 : i32, i32
  }
  func.func @transform_6(%arg0: i32) -> (i32, i32) {
    %c0_i32 = arith.constant 0 : i32
    %c0_i32_0 = arith.constant 0 : i32
    %c0_i32_1 = arith.constant 0 : i32
    return %c0_i32, %c0_i32_0 : i32, i32
  }
  func.func @transform_7(%arg0: i32) -> (i32, i32) {
    %c0_i32 = arith.constant 0 : i32
    %c0_i32_0 = arith.constant 0 : i32
    %c0_i32_1 = arith.constant 0 : i32
    return %c0_i32, %c0_i32_0 : i32, i32
  }
  func.func @transform_8(%arg0: i32) -> (i32, i32) {
    %c0_i32 = arith.constant 0 : i32
    %c0_i32_0 = arith.constant 0 : i32
    %c0_i32_1 = arith.constant 0 : i32
    return %c0_i32, %c0_i32_0 : i32, i32
  }
  func.func @transform_9(%arg0: i32) -> (i32, i32) {
    %c0_i32 = arith.constant 0 : i32
    %c0_i32_0 = arith.constant 0 : i32
    %c0_i32_1 = arith.constant 0 : i32
    return %c0_i32, %c0_i32_0 : i32, i32
  }
  func.func @transform_10(%arg0: i32) -> (i32, i32) {
    %c0_i32 = arith.constant 0 : i32
    %c0_i32_0 = arith.constant 0 : i32
    %c0_i32_1 = arith.constant 0 : i32
    return %c0_i32, %c0_i32_0 : i32, i32
  }
  func.func @transform_11(%arg0: i32) -> (i32, i32) {
    %c0_i32 = arith.constant 0 : i32
    %c0_i32_0 = arith.constant 0 : i32
    %c0_i32_1 = arith.constant 0 : i32
    return %c0_i32, %c0_i32_0 : i32, i32
  }
  func.func @transform_12(%arg0: i32) -> (i32, i32) {
    %c0_i32 = arith.constant 0 : i32
    %c0_i32_0 = arith.constant 0 : i32
    %c0_i32_1 = arith.constant 0 : i32
    return %c0_i32, %c0_i32_0 : i32, i32
  }
  func.func @transform_13(%arg0: i32) -> (i32, i32) {
    %c0_i32 = arith.constant 0 : i32
    %c0_i32_0 = arith.constant 0 : i32
    %c0_i32_1 = arith.constant 0 : i32
    return %c0_i32, %c0_i32_0 : i32, i32
  }
  func.func @transform_14(%arg0: i32) -> (i32, i32) {
    %c0_i32 = arith.constant 0 : i32
    %c0_i32_0 = arith.constant 0 : i32
    %c0_i32_1 = arith.constant 0 : i32
    return %c0_i32, %c0_i32_0 : i32, i32
  }
  func.func @transform_15(%arg0: i32) -> (i32, i32) {
    %c0_i32 = arith.constant 0 : i32
    %c0_i32_0 = arith.constant 0 : i32
    return %arg0, %c0_i32 : i32, i32
  }
}

</mosaic_0001>

<llo_original>
// kernel: multitask_mlp_forward.1
$region0: #{multitask_mlp_forward.1}
  #allocation0 [shape = 'u32[]', space=smem, size = 0x4, offset = 0x4, fixed_abs, tag = 'smem constant byte address 0x4 - core index']
  #allocation1 [shape = 'u32[72,128]{1,0:T(1,128)}', space=vmem, size = 0x9000, scoped, tag = 'internal scratch']
  %s0 = inlined_call_operand.vmem [shape: f32[8,16], index: 0, kind: input, shape index: {}]
  %s1 = inlined_call_operand.hbm [shape: f32[16,32], index: 1, kind: input, shape index: {}]
  %s2 = inlined_call_operand.vmem [shape: f32[1,32], index: 2, kind: input, shape index: {}]
  %s3 = inlined_call_operand.hbm [shape: f32[32,32], index: 3, kind: input, shape index: {}]
  %s4 = inlined_call_operand.vmem [shape: f32[1,32], index: 4, kind: input, shape index: {}]
  %s5 = inlined_call_operand.hbm [shape: f32[32,32], index: 5, kind: input, shape index: {}]
  %s6 = inlined_call_operand.vmem [shape: f32[1,32], index: 6, kind: input, shape index: {}]
  %s7 = inlined_call_operand.hbm [shape: f32[32,32], index: 7, kind: input, shape index: {}]
  %s8 = inlined_call_operand.vmem [shape: f32[1,32], index: 8, kind: input, shape index: {}]
  %s9 = inlined_call_operand.hbm [shape: f32[32,128], index: 9, kind: input, shape index: {}]
  %s10 = inlined_call_operand.vmem [shape: f32[1,128], index: 10, kind: input, shape index: {}]
  %s11 = inlined_call_operand.hbm [shape: f32[128,128], index: 11, kind: input, shape index: {}]
  %s12 = inlined_call_operand.vmem [shape: f32[1,128], index: 12, kind: input, shape index: {}]
  %s13 = inlined_call_operand.hbm [shape: f32[128,128], index: 13, kind: input, shape index: {}]
  %s14 = inlined_call_operand.vmem [shape: f32[1,128], index: 14, kind: input, shape index: {}]
  %s15 = inlined_call_operand.vmem [shape: f32[8,128], index: 15, kind: output, shape index: {}]
  %s16 = sld [smem:[#allocation0]]
  $region98: #{multitask_mlp_forward.1} parent=0
    _
  %s18 = ssub.s32 1, %s16
  %s19 = scalar_select 0, %s18, %s16
  $region1: #{multitask_mlp_forward.1} parent=0
    #allocation2 [shape = 'u8[8192]{0}', space=vmem, size = 0x2000, scoped, tag = 'input window, operand 1, single buffered']
    #allocation3 [shape = 's32[1]{0}', space=sflag, size = 0x4, scoped, tag = 'scoped memory for multitask_mlp_forward.1']
    #allocation4 [shape = 'u8[16384]{0}', space=vmem, size = 0x4000, scoped, tag = 'input window, operand 3, single buffered']
    #allocation5 [shape = 's32[1]{0}', space=sflag, size = 0x4, scoped, tag = 'scoped memory for multitask_mlp_forward.1']
    #allocation6 [shape = 'u8[16384]{0}', space=vmem, size = 0x4000, scoped, tag = 'input window, operand 5, single buffered']
    #allocation7 [shape = 'u8[16384]{0}', space=vmem, size = 0x4000, scoped, tag = 'input window, operand 7, single buffered']
    #allocation8 [shape = 's32[1]{0}', space=sflag, size = 0x4, scoped, tag = 'scoped memory for multitask_mlp_forward.1']
    #allocation9 [shape = 'u8[16384]{0}', space=vmem, size = 0x4000, scoped, tag = 'input window, operand 9, single buffered']
    #allocation10 [shape = 'u8[65536]{0}', space=vmem, size = 0x10000, scoped, tag = 'input window, operand 11, single buffered']
    #allocation11 [shape = 's32[1]{0}', space=sflag, size = 0x4, scoped, tag = 'scoped memory for multitask_mlp_forward.1']
    #allocation12 [shape = 'u8[65536]{0}', space=vmem, size = 0x10000, scoped, tag = 'input window, operand 13, single buffered']
    %20 = vsyncpa [#allocation3], 0
    %21 = vsyncpa [#allocation5], 0
    %22 = vsyncpa [#allocation8], 0
    %23 = vsyncpa [#allocation11], 0
    // Predicated region
    $region2: #{multitask_mlp_forward.1} parent=1 // pred_check
      _
    $region3: #{multitask_mlp_forward.1} parent=1 // pred_check_branch
      %25 = sbr.rel (0) target = $region5
    $region4: #{multitask_mlp_forward.1} parent=1 // pred_region
      _
    $region5: #{multitask_mlp_forward.1} parent=1 // pred_fallthru
      _
    // Predicated region
    $region6: #{multitask_mlp_forward.1} parent=1 // pred_check
      _
    $region7: #{multitask_mlp_forward.1} parent=1 // pred_check_branch
      %27 = sbr.rel (0) target = $region9
    $region8: #{multitask_mlp_forward.1} parent=1 // pred_region
      %29 = vsyncadd [#allocation3], 0
      %s30 = sshll.u32 %s1, 4
      %s31 = int_to_ptr.hbm [resolvable:$true] %s30
      %s32 = sshll.u32 [#allocation2], 4
      %s33 = int_to_ptr.vmem [resolvable:$true] %s32
      %38 = dma.hbm_to_vmem [thread:$0]  %s31, 256, %s33, [#allocation3], 128, 128, 8
    $region9: #{multitask_mlp_forward.1} parent=1 // pred_fallthru
      _
    // Predicated region
    $region10: #{multitask_mlp_forward.1} parent=1 // pred_check
      _
    $region11: #{multitask_mlp_forward.1} parent=1 // pred_check_branch
      %40 = sbr.rel (0) target = $region13
    $region12: #{multitask_mlp_forward.1} parent=1 // pred_region
      _
    $region13: #{multitask_mlp_forward.1} parent=1 // pred_fallthru
      _
    // Predicated region
    $region14: #{multitask_mlp_forward.1} parent=1 // pred_check
      _
    $region15: #{multitask_mlp_forward.1} parent=1 // pred_check_branch
      %42 = sbr.rel (0) target = $region17
    $region16: #{multitask_mlp_forward.1} parent=1 // pred_region
      %44 = vsyncadd [#allocation5], 0
      %s45 = sshll.u32 %s3, 4
      %s46 = int_to_ptr.hbm [resolvable:$true] %s45
      %s47 = sshll.u32 [#allocation4], 4
      %s48 = int_to_ptr.vmem [resolvable:$true] %s47
      %53 = dma.hbm_to_vmem [thread:$0]  %s46, 512, %s48, [#allocation5], 128, 128, 8
    $region17: #{multitask_mlp_forward.1} parent=1 // pred_fallthru
      _
    // Predicated region
    $region18: #{multitask_mlp_forward.1} parent=1 // pred_check
      _
    $region19: #{multitask_mlp_forward.1} parent=1 // pred_check_branch
      %55 = sbr.rel (0) target = $region21
    $region20: #{multitask_mlp_forward.1} parent=1 // pred_region
      _
    $region21: #{multitask_mlp_forward.1} parent=1 // pred_fallthru
      _
    // Predicated region
    $region22: #{multitask_mlp_forward.1} parent=1 // pred_check
      _
    $region23: #{multitask_mlp_forward.1} parent=1 // pred_check_branch
      %57 = sbr.rel (0) target = $region25
    $region24: #{multitask_mlp_forward.1} parent=1 // pred_region
      %59 = vsyncadd [#allocation5], 0
      %s60 = sshll.u32 %s5, 4
      %s61 = int_to_ptr.hbm [resolvable:$true] %s60
      %s62 = sshll.u32 [#allocation6], 4
      %s63 = int_to_ptr.vmem [resolvable:$true] %s62
      %68 = dma.hbm_to_vmem [thread:$0]  %s61, 512, %s63, [#allocation5], 128, 128, 8
    $region25: #{multitask_mlp_forward.1} parent=1 // pred_fallthru
      _
    // Predicated region
    $region26: #{multitask_mlp_forward.1} parent=1 // pred_check
      _
    $region27: #{multitask_mlp_forward.1} parent=1 // pred_check_branch
      %70 = sbr.rel (0) target = $region29
    $region28: #{multitask_mlp_forward.1} parent=1 // pred_region
      _
    $region29: #{multitask_mlp_forward.1} parent=1 // pred_fallthru
      _
    // Predicated region
    $region30: #{multitask_mlp_forward.1} parent=1 // pred_check
      _
    $region31: #{multitask_mlp_forward.1} parent=1 // pred_check_branch
      %72 = sbr.rel (0) target = $region33
    $region32: #{multitask_mlp_forward.1} parent=1 // pred_region
      %74 = vsyncadd [#allocation8], 0
      %s75 = sshll.u32 %s7, 4
      %s76 = int_to_ptr.hbm [resolvable:$true] %s75
      %s77 = sshll.u32 [#allocation7], 4
      %s78 = int_to_ptr.vmem [resolvable:$true] %s77
      %83 = dma.hbm_to_vmem [thread:$0]  %s76, 512, %s78, [#allocation8], 128, 128, 8
    $region33: #{multitask_mlp_forward.1} parent=1 // pred_fallthru
      _
    // Predicated region
    $region34: #{multitask_mlp_forward.1} parent=1 // pred_check
      _
    $region35: #{multitask_mlp_forward.1} parent=1 // pred_check_branch
      %85 = sbr.rel (0) target = $region37
    $region36: #{multitask_mlp_forward.1} parent=1 // pred_region
      _
    $region37: #{multitask_mlp_forward.1} parent=1 // pred_fallthru
      _
    // Predicated region
    $region38: #{multitask_mlp_forward.1} parent=1 // pred_check
      _
    $region39: #{multitask_mlp_forward.1} parent=1 // pred_check_branch
      %87 = sbr.rel (0) target = $region41
    $region40: #{multitask_mlp_forward.1} parent=1 // pred_region
      %89 = vsyncadd [#allocation8], 0
      %s90 = sshll.u32 %s9, 4
      %s91 = int_to_ptr.hbm [resolvable:$true] %s90
      %s92 = sshll.u32 [#allocation9], 4
      %s93 = int_to_ptr.vmem [resolvable:$true] %s92
      %98 = dma.hbm_to_vmem [thread:$0]  %s91, 512, %s93, [#allocation8], 128, 128, 8
    $region41: #{multitask_mlp_forward.1} parent=1 // pred_fallthru
      _
    // Predicated region
    $region42: #{multitask_mlp_forward.1} parent=1 // pred_check
      _
    $region43: #{multitask_mlp_forward.1} parent=1 // pred_check_branch
      %100 = sbr.rel (0) target = $region45
    $region44: #{multitask_mlp_forward.1} parent=1 // pred_region
      _
    $region45: #{multitask_mlp_forward.1} parent=1 // pred_fallthru
      _
    // Predicated region
    $region46: #{multitask_mlp_forward.1} parent=1 // pred_check
      _
    $region47: #{multitask_mlp_forward.1} parent=1 // pred_check_branch
      %102 = sbr.rel (0) target = $region49
    $region48: #{multitask_mlp_forward.1} parent=1 // pred_region
      %104 = vsyncadd [#allocation11], 0
      %s105 = sshll.u32 %s11, 4
      %s106 = int_to_ptr.hbm [resolvable:$true] %s105
      %s107 = sshll.u32 [#allocation10], 4
      %s108 = int_to_ptr.vmem [resolvable:$true] %s107
      %113 = dma.hbm_to_vmem [thread:$0]  %s106, 2048, %s108, [#allocation11], 128, 128, 8
    $region49: #{multitask_mlp_forward.1} parent=1 // pred_fallthru
      _
    // Predicated region
    $region50: #{multitask_mlp_forward.1} parent=1 // pred_check
      _
    $region51: #{multitask_mlp_forward.1} parent=1 // pred_check_branch
      %115 = sbr.rel (0) target = $region53
    $region52: #{multitask_mlp_forward.1} parent=1 // pred_region
      _
    $region53: #{multitask_mlp_forward.1} parent=1 // pred_fallthru
      _
    // Predicated region
    $region54: #{multitask_mlp_forward.1} parent=1 // pred_check
      _
    $region55: #{multitask_mlp_forward.1} parent=1 // pred_check_branch
      %117 = sbr.rel (0) target = $region57
    $region56: #{multitask_mlp_forward.1} parent=1 // pred_region
      %119 = vsyncadd [#allocation11], 0
      %s120 = sshll.u32 %s13, 4
      %s121 = int_to_ptr.hbm [resolvable:$true] %s120
      %s122 = sshll.u32 [#allocation12], 4
      %s123 = int_to_ptr.vmem [resolvable:$true] %s122
      %128 = dma.hbm_to_vmem [thread:$0]  %s121, 2048, %s123, [#allocation11], 128, 128, 8
    $region57: #{multitask_mlp_forward.1} parent=1 // pred_fallthru
      _
    // Predicated region
    $region58: #{multitask_mlp_forward.1} parent=1 // pred_check
      _
    $region59: #{multitask_mlp_forward.1} parent=1 // pred_check_branch
      %130 = sbr.rel (0) target = $region61
    $region60: #{multitask_mlp_forward.1} parent=1 // pred_region
      _
    $region61: #{multitask_mlp_forward.1} parent=1 // pred_fallthru
      _
    // Predicated region
    $region62: #{multitask_mlp_forward.1} parent=1 // pred_check
      _
    $region63: #{multitask_mlp_forward.1} parent=1 // pred_check_branch
      %132 = sbr.rel (0) target = $region65
    $region64: #{multitask_mlp_forward.1} parent=1 // pred_region
      %134 = dma.done [#allocation3], 256
    $region65: #{multitask_mlp_forward.1} parent=1 // pred_fallthru
      _
    // Predicated region
    $region66: #{multitask_mlp_forward.1} parent=1 // pred_check
      _
    $region67: #{multitask_mlp_forward.1} parent=1 // pred_check_branch
      %136 = sbr.rel (0) target = $region69
    $region68: #{multitask_mlp_forward.1} parent=1 // pred_region
      %138 = dma.done [#allocation5], 512
    $region69: #{multitask_mlp_forward.1} parent=1 // pred_fallthru
      _
    // Predicated region
    $region70: #{multitask_mlp_forward.1} parent=1 // pred_check
      _
    $region71: #{multitask_mlp_forward.1} parent=1 // pred_check_branch
      %140 = sbr.rel (0) target = $region73
    $region72: #{multitask_mlp_forward.1} parent=1 // pred_region
      %142 = dma.done [#allocation5], 512
    $region73: #{multitask_mlp_forward.1} parent=1 // pred_fallthru
      _
    // Predicated region
    $region74: #{multitask_mlp_forward.1} parent=1 // pred_check
      _
    $region75: #{multitask_mlp_forward.1} parent=1 // pred_check_branch
      %144 = sbr.rel (0) target = $region77
    $region76: #{multitask_mlp_forward.1} parent=1 // pred_region
      %146 = dma.done [#allocation8], 512
    $region77: #{multitask_mlp_forward.1} parent=1 // pred_fallthru
      _
    // Predicated region
    $region78: #{multitask_mlp_forward.1} parent=1 // pred_check
      _
    $region79: #{multitask_mlp_forward.1} parent=1 // pred_check_branch
      %148 = sbr.rel (0) target = $region81
    $region80: #{multitask_mlp_forward.1} parent=1 // pred_region
      %150 = dma.done [#allocation8], 512
    $region81: #{multitask_mlp_forward.1} parent=1 // pred_fallthru
      _
    // Predicated region
    $region82: #{multitask_mlp_forward.1} parent=1 // pred_check
      _
    $region83: #{multitask_mlp_forward.1} parent=1 // pred_check_branch
      %152 = sbr.rel (0) target = $region85
    $region84: #{multitask_mlp_forward.1} parent=1 // pred_region
      %154 = dma.done [#allocation11], 2048
    $region85: #{multitask_mlp_forward.1} parent=1 // pred_fallthru
      _
    // Predicated region
    $region86: #{multitask_mlp_forward.1} parent=1 // pred_check
      _
    $region87: #{multitask_mlp_forward.1} parent=1 // pred_check_branch
      %156 = sbr.rel (0) target = $region89
    $region88: #{multitask_mlp_forward.1} parent=1 // pred_region
      %158 = dma.done [#allocation11], 2048
    $region89: #{multitask_mlp_forward.1} parent=1 // pred_fallthru
      _
    %v159 = vld [vmem:[%s0] sm:$0xff]
    %v160 = vld [vmem:[#allocation2] sm:$0xff]
    %v161 = vld [vmem:[#allocation2 + $0x8] sm:$0xff]
    %v162 = vld [vmem:[%s2] sm:$0x1]
    %v164 = vperm.slane %v162, 0
    %vm166 = vcmask 130048
    %v168 = vsel %vm166, %v159, 0
    %170 = vmatpush.msra.mxu0 0.0
    %171 = vmatpush.msra.mxu0 0.0
    %172 = vmatpush.msra.mxu0 0.0
    %173 = vmatpush.msra.mxu0 0.0
    %174 = vmatpush.msra.mxu0 0.0
    %175 = vmatpush.msra.mxu0 0.0
    %176 = vmatpush.msra.mxu0 0.0
    %177 = vmatpush.msra.mxu0 0.0
    %178 = vmatpush.msra.mxu0 0.0
    %179 = vmatpush.msra.mxu0 0.0
    %180 = vmatpush.msra.mxu0 0.0
    %181 = vmatpush.msra.mxu0 0.0
    %182 = vmatpush.msra.mxu0 0.0
    %183 = vmatpush.msra.mxu0 0.0
    %184 = vmatpush.msra.mxu0 %v161
    %185 = vmatpush.msra.mxu0 %v160
    %186 = vmatmul.f32.gmra.mxu0 %v168
    %v187 = vpop.f32.mrf.mxu0
    %v188 = vadd.f32 %v164, %v187
    %189 = vdwg.mxu0
    %v190 = vmax.f32 %v188, 0.0
    %v191 = vld [vmem:[#allocation4] sm:$0xff]
    %v192 = vld [vmem:[#allocation4 + $0x8] sm:$0xff]
    %v193 = vld [vmem:[#allocation4 + $0x10] sm:$0xff]
    %v194 = vld [vmem:[#allocation4 + $0x18] sm:$0xff]
    %v195 = vld [vmem:[%s4] sm:$0x1]
    %v197 = vperm.slane %v195, 0
    %vm199 = vcmask 261120
    %v201 = vsel %vm199, %v190, 0
    %203 = vmatpush.msra.mxu0 0.0
    %204 = vmatpush.msra.mxu0 0.0
    %205 = vmatpush.msra.mxu0 0.0
    %206 = vmatpush.msra.mxu0 0.0
    %207 = vmatpush.msra.mxu0 0.0
    %208 = vmatpush.msra.mxu0 0.0
    %209 = vmatpush.msra.mxu0 0.0
    %210 = vmatpush.msra.mxu0 0.0
    %211 = vmatpush.msra.mxu0 0.0
    %212 = vmatpush.msra.mxu0 0.0
    %213 = vmatpush.msra.mxu0 0.0
    %214 = vmatpush.msra.mxu0 0.0
    %215 = vmatpush.msra.mxu0 %v194
    %216 = vmatpush.msra.mxu0 %v193
    %217 = vmatpush.msra.mxu0 %v192
    %218 = vmatpush.msra.mxu0 %v191
    %219 = vmatmul.f32.gmra.mxu0 %v201
    %v220 = vpop.f32.mrf.mxu0
    %v221 = vadd.f32 %v197, %v220
    %222 = vdwg.mxu0
    %v223 = vadd.f32 %v190, %v221
    %v224 = vmax.f32 %v223, 0.0
    %v225 = vld [vmem:[#allocation6] sm:$0xff]
    %v226 = vld [vmem:[#allocation6 + $0x8] sm:$0xff]
    %v227 = vld [vmem:[#allocation6 + $0x10] sm:$0xff]
    %v228 = vld [vmem:[#allocation6 + $0x18] sm:$0xff]
    %v229 = vld [vmem:[%s6] sm:$0x1]
    %v231 = vperm.slane %v229, 0
    %v234 = vsel %vm199, %v224, 0
    %236 = vmatpush.msra.mxu0 0.0
    %237 = vmatpush.msra.mxu0 0.0
    %238 = vmatpush.msra.mxu0 0.0
    %239 = vmatpush.msra.mxu0 0.0
    %240 = vmatpush.msra.mxu0 0.0
    %241 = vmatpush.msra.mxu0 0.0
    %242 = vmatpush.msra.mxu0 0.0
    %243 = vmatpush.msra.mxu0 0.0
    %244 = vmatpush.msra.mxu0 0.0
    %245 = vmatpush.msra.mxu0 0.0
    %246 = vmatpush.msra.mxu0 0.0
    %247 = vmatpush.msra.mxu0 0.0
    %248 = vmatpush.msra.mxu0 %v228
    %249 = vmatpush.msra.mxu0 %v227
    %250 = vmatpush.msra.mxu0 %v226
    %251 = vmatpush.msra.mxu0 %v225
    %252 = vmatmul.f32.gmra.mxu0 %v234
    %v253 = vpop.f32.mrf.mxu0
    %v254 = vadd.f32 %v231, %v253
    %255 = vdwg.mxu0
    %v256 = vmax.f32 %v254, 0.0
    %v257 = vld [vmem:[#allocation7] sm:$0xff]
    %v258 = vld [vmem:[#allocation7 + $0x8] sm:$0xff]
    %v259 = vld [vmem:[#allocation7 + $0x10] sm:$0xff]
    %v260 = vld [vmem:[#allocation7 + $0x18] sm:$0xff]
    %v261 = vld [vmem:[%s8] sm:$0x1]
    %v263 = vperm.slane %v261, 0
    %v266 = vsel %vm199, %v256, 0
    %268 = vmatpush.msra.mxu0 0.0
    %269 = vmatpush.msra.mxu0 0.0
    %270 = vmatpush.msra.mxu0 0.0
    %271 = vmatpush.msra.mxu0 0.0
    %272 = vmatpush.msra.mxu0 0.0
    %273 = vmatpush.msra.mxu0 0.0
    %274 = vmatpush.msra.mxu0 0.0
    %275 = vmatpush.msra.mxu0 0.0
    %276 = vmatpush.msra.mxu0 0.0
    %277 = vmatpush.msra.mxu0 0.0
    %278 = vmatpush.msra.mxu0 0.0
    %279 = vmatpush.msra.mxu0 0.0
    %280 = vmatpush.msra.mxu0 %v260
    %281 = vmatpush.msra.mxu0 %v259
    %282 = vmatpush.msra.mxu0 %v258
    %283 = vmatpush.msra.mxu0 %v257
    %284 = vmatmul.f32.gmra.mxu0 %v266
    %v285 = vpop.f32.mrf.mxu0
    %v286 = vadd.f32 %v263, %v285
    %287 = vdwg.mxu0
    %v288 = vld [vmem:[#allocation9] sm:$0xff]
    %v289 = vld [vmem:[#allocation9 + $0x8] sm:$0xff]
    %v290 = vld [vmem:[#allocation9 + $0x10] sm:$0xff]
    %v291 = vld [vmem:[#allocation9 + $0x18] sm:$0xff]
    %v292 = vld [vmem:[%s10] sm:$0x1]
    %v294 = vperm.slane %v292, 0
    %v297 = vsel %vm199, %v286, 0
    %299 = vmatpush.msra.mxu0 0.0
    %300 = vmatpush.msra.mxu0 0.0
    %301 = vmatpush.msra.mxu0 0.0
    %302 = vmatpush.msra.mxu0 0.0
    %303 = vmatpush.msra.mxu0 0.0
    %304 = vmatpush.msra.mxu0 0.0
    %305 = vmatpush.msra.mxu0 0.0
    %306 = vmatpush.msra.mxu0 0.0
    %307 = vmatpush.msra.mxu0 0.0
    %308 = vmatpush.msra.mxu0 0.0
    %309 = vmatpush.msra.mxu0 0.0
    %310 = vmatpush.msra.mxu0 0.0
    %311 = vmatpush.msra.mxu0 %v291
    %312 = vmatpush.msra.mxu0 %v290
    %313 = vmatpush.msra.mxu0 %v289
    %314 = vmatpush.msra.mxu0 %v288
    %315 = vmatmul.f32.gmra.mxu0 %v297
    %v316 = vpop.f32.mrf.mxu0
    %v317 = vadd.f32 %v294, %v316
    %318 = vdwg.mxu0
    %v319 = vmax.f32 %v317, 0.0
    %v320 = vld [vmem:[#allocation10] sm:$0xff]
    %v321 = vld [vmem:[#allocation10 + $0x8] sm:$0xff]
    %v322 = vld [vmem:[#allocation10 + $0x10] sm:$0xff]
    %v323 = vld [vmem:[#allocation10 + $0x18] sm:$0xff]
    %v324 = vld [vmem:[#allocation10 + $0x20] sm:$0xff]
    %v325 = vld [vmem:[#allocation10 + $0x28] sm:$0xff]
    %v326 = vld [vmem:[#allocation10 + $0x30] sm:$0xff]
    %v327 = vld [vmem:[#allocation10 + $0x38] sm:$0xff]
    %v328 = vld [vmem:[#allocation10 + $0x40] sm:$0xff]
    %v329 = vld [vmem:[#allocation10 + $0x48] sm:$0xff]
    %v330 = vld [vmem:[#allocation10 + $0x50] sm:$0xff]
    %v331 = vld [vmem:[#allocation10 + $0x58] sm:$0xff]
    %v332 = vld [vmem:[#allocation10 + $0x60] sm:$0xff]
    %v333 = vld [vmem:[#allocation10 + $0x68] sm:$0xff]
    %v334 = vld [vmem:[#allocation10 + $0x70] sm:$0xff]
    %v335 = vld [vmem:[#allocation10 + $0x78] sm:$0xff]
    %v336 = vld [vmem:[%s12] sm:$0x1]
    %v338 = vperm.slane %v336, 0
    %340 = vmatpush.msra.mxu0 %v335
    %341 = vmatpush.msra.mxu0 %v334
    %342 = vmatpush.msra.mxu0 %v333
    %343 = vmatpush.msra.mxu0 %v332
    %344 = vmatpush.msra.mxu0 %v331
    %345 = vmatpush.msra.mxu0 %v330
    %346 = vmatpush.msra.mxu0 %v329
    %347 = vmatpush.msra.mxu0 %v328
    %348 = vmatpush.msra.mxu0 %v327
    %349 = vmatpush.msra.mxu0 %v326
    %350 = vmatpush.msra.mxu0 %v325
    %351 = vmatpush.msra.mxu0 %v324
    %352 = vmatpush.msra.mxu0 %v323
    %353 = vmatpush.msra.mxu0 %v322
    %354 = vmatpush.msra.mxu0 %v321
    %355 = vmatpush.msra.mxu0 %v320
    %356 = vmatmul.f32.gmra.mxu0 %v319
    %v357 = vpop.f32.mrf.mxu0
    %v358 = vadd.f32 %v338, %v357
    %359 = vdwg.mxu0
    %v360 = vadd.f32 %v319, %v358
    %v361 = vmax.f32 %v360, 0.0
    %v362 = vld [vmem:[#allocation12] sm:$0xff]
    %v363 = vld [vmem:[#allocation12 + $0x8] sm:$0xff]
    %v364 = vld [vmem:[#allocation12 + $0x10] sm:$0xff]
    %v365 = vld [vmem:[#allocation12 + $0x18] sm:$0xff]
    %v366 = vld [vmem:[#allocation12 + $0x20] sm:$0xff]
    %v367 = vld [vmem:[#allocation12 + $0x28] sm:$0xff]
    %v368 = vld [vmem:[#allocation12 + $0x30] sm:$0xff]
    %v369 = vld [vmem:[#allocation12 + $0x38] sm:$0xff]
    %v370 = vld [vmem:[#allocation12 + $0x40] sm:$0xff]
    %v371 = vld [vmem:[#allocation12 + $0x48] sm:$0xff]
    %v372 = vld [vmem:[#allocation12 + $0x50] sm:$0xff]
    %v373 = vld [vmem:[#allocation12 + $0x58] sm:$0xff]
    %v374 = vld [vmem:[#allocation12 + $0x60] sm:$0xff]
    %v375 = vld [vmem:[#allocation12 + $0x68] sm:$0xff]
    %v376 = vld [vmem:[#allocation12 + $0x70] sm:$0xff]
    %v377 = vld [vmem:[#allocation12 + $0x78] sm:$0xff]
    %v378 = vld [vmem:[%s14] sm:$0x1]
    %v380 = vperm.slane %v378, 0
    %382 = vmatpush.msra.mxu0 %v377
    %383 = vmatpush.msra.mxu0 %v376
    %384 = vmatpush.msra.mxu0 %v375
    %385 = vmatpush.msra.mxu0 %v374
    %386 = vmatpush.msra.mxu0 %v373
    %387 = vmatpush.msra.mxu0 %v372
    %388 = vmatpush.msra.mxu0 %v371
    %389 = vmatpush.msra.mxu0 %v370
    %390 = vmatpush.msra.mxu0 %v369
    %391 = vmatpush.msra.mxu0 %v368
    %392 = vmatpush.msra.mxu0 %v367
    %393 = vmatpush.msra.mxu0 %v366
    %394 = vmatpush.msra.mxu0 %v365
    %395 = vmatpush.msra.mxu0 %v364
    %396 = vmatpush.msra.mxu0 %v363
    %397 = vmatpush.msra.mxu0 %v362
    %398 = vmatmul.f32.gmra.mxu0 %v361
    %v399 = vpop.f32.mrf.mxu0
    %v400 = vadd.f32 %v380, %v399
    %401 = vdwg.mxu0
    %402 = vst [vmem:[%s15] sm:$0xff] %v400
    // Predicated region
    $region90: #{multitask_mlp_forward.1} parent=1 // pred_check
      _
    $region91: #{multitask_mlp_forward.1} parent=1 // pred_check_branch
      %404 = sbr.rel (0) target = $region93
    $region92: #{multitask_mlp_forward.1} parent=1 // pred_region
      _
    $region93: #{multitask_mlp_forward.1} parent=1 // pred_fallthru
      _
    // Predicated region
    $region94: #{multitask_mlp_forward.1} parent=1 // pred_check
      _
    $region95: #{multitask_mlp_forward.1} parent=1 // pred_check_branch
      %406 = sbr.rel (0) target = $region97
    $region96: #{multitask_mlp_forward.1} parent=1 // pred_region
      _
    $region97: #{multitask_mlp_forward.1} parent=1 // pred_fallthru
      _
    %407 = vsyncpa [#allocation3], 1
    %408 = vsyncpa [#allocation5], 1
    %409 = vsyncpa [#allocation8], 1
    %410 = vsyncpa [#allocation11], 1

</llo_original>
